<compile_context>
chip_gen: v7x
topology: tpu7x:2x2x1
jax: 0.10.0
libtpu: 0.0.40
codegen_flags: <defaults>
</compile_context>

<pallas_src>
import jax
import jax.numpy as jnp
from jax.experimental import pallas as pl
from jax.experimental.pallas import tpu as pltpu

_LANES = 128
_SUBLANES = 8
# 2048 rows x 128 lanes x 4 B = 1 MiB per input block; 2 inputs x 2 buffers
# = 4 MiB of pipelined VMEM -> fits the v5e 16 MiB scoped default and the
# v7x 32 MiB scoped / 64 MiB physical VMEM with plenty of headroom.
_TARGET_BLOCK_ROWS = 2048


def _sse_kernel(p_ref, t_ref, o_ref, acc_ref):
    """Accumulate an (8,128) vector of partial sums of (p - t)^2 over the
    inner (reduction) grid axis; emit the partial tile at the last step."""
    k = pl.program_id(1)

    @pl.when(k == 0)
    def _():
        acc_ref[...] = jnp.zeros_like(acc_ref)

    d = p_ref[...].astype(jnp.float32) - t_ref[...].astype(jnp.float32)
    # Keep the per-step accumulate on the VPU: fold row-groups of 8 into a
    # single (8,128) vreg-shaped partial (no cross-lane/sublane reduce here).
    acc_ref[...] += (d * d).reshape(-1, _SUBLANES, _LANES).sum(axis=0)

    @pl.when(k == pl.num_programs(1) - 1)
    def _():
        o_ref[...] = acc_ref[...].reshape(o_ref.shape)


def _sum_squared_error(preds, targets):
    """Pallas-backed sum of squared differences over all elements."""
    p = preds.reshape(-1)
    t = targets.reshape(-1)
    n = p.shape[0]
    itemsize = jnp.dtype(p.dtype).itemsize

    tile_elems = _SUBLANES * _LANES  # one (8,128) tile = 1024 elements
    rows_all = (n // tile_elems) * _SUBLANES  # rows (multiple of 8) available

    if rows_all == 0:
        # Too small for even one (8,128) tile: pure JAX.
        d = p.astype(jnp.float32) - t.astype(jnp.float32)
        return jnp.sum(d * d)

    block_rows = min(_TARGET_BLOCK_ROWS, rows_all)
    num_tiles = rows_all // block_rows
    # Shard row tiles across two "parallel" slots when the count divides
    # evenly (lets v7x use both TensorCores; harmless on v5e/v6e).
    num_splits = 2 if (num_tiles >= 2 and num_tiles % 2 == 0) else 1
    tiles_per_split = num_tiles // num_splits

    rows_kernel = num_splits * tiles_per_split * block_rows
    n_kernel = rows_kernel * _LANES

    if n_kernel == n:
        p_main, t_main = p, t
    else:
        p_main, t_main = p[:n_kernel], t[:n_kernel]
    p2 = p_main.reshape(rows_kernel, _LANES)
    t2 = t_main.reshape(rows_kernel, _LANES)

    cost = pl.CostEstimate(
        flops=3 * n_kernel,
        transcendentals=0,
        bytes_accessed=2 * n_kernel * itemsize
        + num_splits * _SUBLANES * _LANES * 4,
    )

    partial = pl.pallas_call(
        _sse_kernel,
        out_shape=jax.ShapeDtypeStruct((num_splits, _SUBLANES, _LANES),
                                       jnp.float32),
        grid_spec=pltpu.PrefetchScalarGridSpec(
            num_scalar_prefetch=0,
            grid=(num_splits, tiles_per_split),
            in_specs=[
                pl.BlockSpec((block_rows, _LANES),
                             lambda s, k: (s * tiles_per_split + k, 0)),
                pl.BlockSpec((block_rows, _LANES),
                             lambda s, k: (s * tiles_per_split + k, 0)),
            ],
            out_specs=pl.BlockSpec((1, _SUBLANES, _LANES),
                                   lambda s, k: (s, 0, 0)),
            scratch_shapes=[pltpu.VMEM((_SUBLANES, _LANES), jnp.float32)],
        ),
        compiler_params=pltpu.CompilerParams(
            dimension_semantics=("parallel", "arbitrary"),
        ),
        cost_estimate=cost,
    )(p2, t2)

    sse = jnp.sum(partial)

    # Tail not covered by whole blocks (< one block per operand): plain JAX.
    if n_kernel < n:
        dt_ = p[n_kernel:].astype(jnp.float32) - t[n_kernel:].astype(jnp.float32)
        sse = sse + jnp.sum(dt_ * dt_)
    return sse


def to_float(data):
    try:
        return float(data)
    except Exception:
        return [to_float(x) for x in data]


class WeakMSELoss:
    """Concrete instance of the abstract `weak_loss` module (MSE weak loss)."""

    def get_loss(self, preds, targets):
        n = preds.size
        sse = _sum_squared_error(preds, targets)
        mse = sse / jnp.float32(n)
        return mse, {"mse": mse, "sse": sse}

    def forward(self, preds, targets):
        # NOTE: to_float() forces a device->host sync per value; kept here
        # only because the reference module's forward() does exactly this.
        loss, dic = self.get_loss(preds, targets)
        for key, val in dic.items():
            dic[key] = to_float(val)
        return (loss, dic)

    __call__ = forward


if __name__ == "__main__":
    key = jax.random.PRNGKey(0)
    k1, k2 = jax.random.split(key)
    # NCHW inputs, small shapes
    preds = jax.random.normal(k1, (2, 4, 16, 16), dtype=jnp.float32)
    targets = jax.random.normal(k2, (2, 4, 16, 16), dtype=jnp.float32)

    module = WeakMSELoss()
    loss, dic = module(preds, targets)
    loss = jax.block_until_ready(loss)

    # sanity check against plain JAX reference
    ref = jnp.mean((preds - targets) ** 2)
    assert abs(float(loss) - float(ref)) < 1e-5, (float(loss), float(ref))
    assert isinstance(dic["mse"], float) and isinstance(dic["sse"], float)

    # exercise the non-tile-aligned tail path
    p3 = jax.random.normal(k1, (2, 3, 33, 17), dtype=jnp.float32)
    t3 = jax.random.normal(k2, (2, 3, 33, 17), dtype=jnp.float32)
    l3, _ = module(p3, t3)
    r3 = float(jnp.mean((p3 - t3) ** 2))
    assert abs(float(l3) - r3) <= 1e-4 * max(1.0, abs(r3)), (float(l3), r3)

    # exercise the multi-tile / two-split path
    p4 = jax.random.normal(k1, (4, 8, 128, 160), dtype=jnp.float32)
    t4 = jax.random.normal(k2, (4, 8, 128, 160), dtype=jnp.float32)
    l4, _ = module(p4, t4)
    r4 = float(jnp.mean((p4 - t4) ** 2))
    assert abs(float(l4) - r4) <= 1e-4 * max(1.0, abs(r4)), (float(l4), r4)

    print("KERNEL_OK")
</pallas_src>

<mosaic_0001>
module attributes {stable_mosaic.version = 11 : i64} {
  func.func @_sse_kernel(%arg0: i32, %arg1: i32, %arg2: memref<16x128xf32, #tpu.memory_space<vmem>>, %arg3: memref<16x128xf32, #tpu.memory_space<vmem>>, %arg4: memref<1x8x128xf32, #tpu.memory_space<vmem>>, %arg5: memref<8x128xf32, #tpu.memory_space<vmem>>) attributes {dimension_semantics = [#tpu.dimension_semantics<parallel>, #tpu.dimension_semantics<arbitrary>], iteration_bounds = array<i64: 1, 1>, scalar_prefetch = 0 : i64, scratch_operands = 1 : i64, tpu.core_type = #tpu.core_type<tc>, window_params = [{transform_indices = @transform_0, window_bounds = array<i64: 16, 128>}, {transform_indices = @transform_1, window_bounds = array<i64: 16, 128>}, {transform_indices = @transform_2, window_bounds = array<i64: 1, 8, 128>}]} {
    %c0_i32 = arith.constant 0 : i32
    %0 = arith.cmpi eq, %arg1, %c0_i32 : i32
    %1 = arith.extui %0 : i1 to i32
    %c0_i32_0 = arith.constant 0 : i32
    %2 = arith.cmpi ne, %1, %c0_i32_0 : i32
    scf.if %2 {
      %cst_10 = arith.constant 0.000000e+00 : f32
      %15 = vector.broadcast %cst_10 : f32 to vector<8x128xf32>
      %c0_11 = arith.constant 0 : index
      %c0_12 = arith.constant 0 : index
      %16 = vector.load %arg5[%c0_11, %c0_12] : memref<8x128xf32, #tpu.memory_space<vmem>>, vector<8x128xf32>
      tpu.vector_store %arg5[%c0_11, %c0_12], %15 {strides = array<i32>} : memref<8x128xf32, #tpu.memory_space<vmem>>, vector<8x128xf32>,
    } else {
    }
    %c0 = arith.constant 0 : index
    %c0_1 = arith.constant 0 : index
    %3 = vector.load %arg2[%c0, %c0_1] : memref<16x128xf32, #tpu.memory_space<vmem>>, vector<16x128xf32>
    %c0_2 = arith.constant 0 : index
    %c0_3 = arith.constant 0 : index
    %4 = vector.load %arg3[%c0_2, %c0_3] : memref<16x128xf32, #tpu.memory_space<vmem>>, vector<16x128xf32>
    %5 = arith.subf %3, %4 : vector<16x128xf32>
    %c0_4 = arith.constant 0 : index
    %c0_5 = arith.constant 0 : index
    %6 = vector.load %arg5[%c0_4, %c0_5] : memref<8x128xf32, #tpu.memory_space<vmem>>, vector<8x128xf32>
    %7 = arith.mulf %5, %5 : vector<16x128xf32>
    %8 = vector.shape_cast %7 : vector<16x128xf32> to vector<2x8x128xf32>
    %cst = arith.constant dense<0.000000e+00> : vector<8x128xf32>
    %9 = vector.multi_reduction <add>, %8, %cst [0] : vector<2x8x128xf32> to vector<8x128xf32>
    %10 = arith.addf %6, %9 : vector<8x128xf32>
    %c0_6 = arith.constant 0 : index
    %c0_7 = arith.constant 0 : index
    %11 = vector.load %arg5[%c0_6, %c0_7] : memref<8x128xf32, #tpu.memory_space<vmem>>, vector<8x128xf32>
    tpu.vector_store %arg5[%c0_6, %c0_7], %10 {strides = array<i32>} : memref<8x128xf32, #tpu.memory_space<vmem>>, vector<8x128xf32>,
    %c0_i32_8 = arith.constant 0 : i32
    %12 = arith.cmpi eq, %arg1, %c0_i32_8 : i32
    %13 = arith.extui %12 : i1 to i32
    %c0_i32_9 = arith.constant 0 : i32
    %14 = arith.cmpi ne, %13, %c0_i32_9 : i32
    scf.if %14 {
      %c0_10 = arith.constant 0 : index
      %c0_11 = arith.constant 0 : index
      %15 = vector.load %arg5[%c0_10, %c0_11] : memref<8x128xf32, #tpu.memory_space<vmem>>, vector<8x128xf32>
      %16 = vector.shape_cast %15 : vector<8x128xf32> to vector<1x8x128xf32>
      %c0_12 = arith.constant 0 : index
      %c0_13 = arith.constant 0 : index
      %c0_14 = arith.constant 0 : index
      %17 = vector.load %arg4[%c0_12, %c0_13, %c0_14] : memref<1x8x128xf32, #tpu.memory_space<vmem>>, vector<1x8x128xf32>
      tpu.vector_store %arg4[%c0_12, %c0_13, %c0_14], %16 {strides = array<i32>} : memref<1x8x128xf32, #tpu.memory_space<vmem>>, vector<1x8x128xf32>,
    } else {
    }
    return
  }
  func.func @transform_0(%arg0: i32, %arg1: i32) -> (i32, i32) {
    %c1_i32 = arith.constant 1 : i32
    %0 = arith.muli %arg0, %c1_i32 : i32
    %1 = arith.addi %0, %arg1 : i32
    %c0_i32 = arith.constant 0 : i32
    %c0_i32_0 = arith.constant 0 : i32
    return %1, %c0_i32 : i32, i32
  }
  func.func @transform_1(%arg0: i32, %arg1: i32) -> (i32, i32) {
    %c1_i32 = arith.constant 1 : i32
    %0 = arith.muli %arg0, %c1_i32 : i32
    %1 = arith.addi %0, %arg1 : i32
    %c0_i32 = arith.constant 0 : i32
    %c0_i32_0 = arith.constant 0 : i32
    return %1, %c0_i32 : i32, i32
  }
  func.func @transform_2(%arg0: i32, %arg1: i32) -> (i32, i32, i32) {
    %c0_i32 = arith.constant 0 : i32
    %c0_i32_0 = arith.constant 0 : i32
    %c0_i32_1 = arith.constant 0 : i32
    return %arg0, %c0_i32, %c0_i32_0 : i32, i32, i32
  }
}

</mosaic_0001>

<llo_original>
// kernel: tpu_custom_call.1
$region0: #{tpu_custom_call.1}
  #allocation0 [shape = 'u32[]', space=smem, size = 0x4, offset = 0x4, fixed_abs, tag = 'smem constant byte address 0x4 - core index']
  #allocation1 [shape = 'u32[144,128]{1,0:T(1,128)}', space=vmem, size = 0x12000, scoped, tag = 'internal scratch']
  #allocation2 [shape = 'f32[8,128]{1,0:T(8,128)}', space=vmem, size = 0x1000, scoped, tag = 'scratch operand']
  %s0 = inlined_call_operand.hbm [shape: f32[16,128], index: 0, kind: input, shape index: {}]
  %s1 = inlined_call_operand.hbm [shape: f32[16,128], index: 1, kind: input, shape index: {}]
  %s2 = inlined_call_operand.hbm [shape: f32[1,8,128], index: 2, kind: output, shape index: {}]
  %s3 = sld [smem:[#allocation0]]
  $region34: #{tpu_custom_call.1} parent=0
    _
  %s5 = ssub.s32 1, %s3
  %s6 = scalar_select 0, %s5, %s3
  $region1: #{tpu_custom_call.1} parent=0
    #allocation3 [shape = 'u8[8192]{0}', space=vmem, size = 0x2000, scoped, tag = 'input window, operand 0, single buffered']
    #allocation4 [shape = 's32[1]{0}', space=sflag, size = 0x4, scoped, tag = 'scoped memory for tpu_custom_call.1']
    #allocation5 [shape = 's32[1]{0}', space=sflag, size = 0x4, scoped, tag = 'scoped memory for tpu_custom_call.1']
    #allocation6 [shape = 'u8[8192]{0}', space=vmem, size = 0x2000, scoped, tag = 'input window, operand 1, single buffered']
    #allocation7 [shape = 's32[1]{0}', space=sflag, size = 0x4, scoped, tag = 'scoped memory for tpu_custom_call.1']
    #allocation8 [shape = 'u8[4096]{0}', space=vmem, size = 0x1000, scoped, tag = 'output window, operand 0, single buffered']
    %7 = vsyncpa [#allocation4], 0
    %8 = vsyncpa [#allocation7], 0
    %9 = vsyncpa [#allocation5], 0
    // Predicated region
    $region2: #{tpu_custom_call.1} parent=1 // pred_check
      _
    $region3: #{tpu_custom_call.1} parent=1 // pred_check_branch
      %11 = sbr.rel (0) target = $region5
    $region4: #{tpu_custom_call.1} parent=1 // pred_region
      %s12 = sadd.s32 0, 0
      %s13 = smul.u32 2, %s12
      %s15 = ssub.s32 256, 256
      %16 = vsyncadd [#allocation4], %s15
      %s17 = smul.addr %s13, 128
      %s18 = scalar_lea.hbm %s0, %s17
      %s19 = sshll.u32 [#allocation3], 4
      %s20 = int_to_ptr.vmem [resolvable:$true] %s19
      %25 = dma.hbm_to_vmem [thread:$0]  %s18, 256, %s20, [#allocation4], 128, 128, 8
    $region5: #{tpu_custom_call.1} parent=1 // pred_fallthru
      _
    // Predicated region
    $region6: #{tpu_custom_call.1} parent=1 // pred_check
      _
    $region7: #{tpu_custom_call.1} parent=1 // pred_check_branch
      %27 = sbr.rel (0) target = $region9
    $region8: #{tpu_custom_call.1} parent=1 // pred_region
      %s28 = sadd.s32 0, 0
      %s29 = smul.u32 2, %s28
      %s31 = ssub.s32 256, 256
      %32 = vsyncadd [#allocation7], %s31
      %s33 = smul.addr %s29, 128
      %s34 = scalar_lea.hbm %s1, %s33
      %s35 = sshll.u32 [#allocation6], 4
      %s36 = int_to_ptr.vmem [resolvable:$true] %s35
      %41 = dma.hbm_to_vmem [thread:$0]  %s34, 256, %s36, [#allocation7], 128, 128, 8
    $region9: #{tpu_custom_call.1} parent=1 // pred_fallthru
      _
    // Predicated region
    $region10: #{tpu_custom_call.1} parent=1 // pred_check
      _
    $region11: #{tpu_custom_call.1} parent=1 // pred_check_branch
      %43 = sbr.rel (0) target = $region13
    $region12: #{tpu_custom_call.1} parent=1 // pred_region
      %44 = dma.done [#allocation4], 256
    $region13: #{tpu_custom_call.1} parent=1 // pred_fallthru
      _
    // Predicated region
    $region14: #{tpu_custom_call.1} parent=1 // pred_check
      _
    $region15: #{tpu_custom_call.1} parent=1 // pred_check_branch
      %46 = sbr.rel (0) target = $region17
    $region16: #{tpu_custom_call.1} parent=1 // pred_region
      %47 = dma.done [#allocation7], 256
    $region17: #{tpu_custom_call.1} parent=1 // pred_fallthru
      _
    %s48 = sadd.s32 0, 0
    %s49 = smul.u32 2, %s48
    %s50 = sadd.s32 0, 0
    %s51 = smul.u32 2, %s50
    %p52 = scmp.eq.s32.totalorder 0, 0
    // Predicated region
    $region18: #{tpu_custom_call.1} parent=1 // pred_check
      %p53 = pneg %p52
    $region19: #{tpu_custom_call.1} parent=1 // pred_check_branch
      %55 = sbr.rel (%p53) target = $region21
    $region20: #{tpu_custom_call.1} parent=1 // pred_region
      %56 = vst [vmem:[#allocation2] sm:$0xff] 0.0
    $region21: #{tpu_custom_call.1} parent=1 // pred_fallthru
      _
    %v57 = vld [vmem:[#allocation3] sm:$0xff]
    %v58 = vld [vmem:[#allocation3 + $0x8] sm:$0xff]
    %v59 = vld [vmem:[#allocation6] sm:$0xff]
    %v60 = vld [vmem:[#allocation6 + $0x8] sm:$0xff]
    %v61 = vsub.f32 %v57, %v59
    %v62 = vsub.f32 %v58, %v60
    %v63 = vld [vmem:[#allocation2] sm:$0xff]
    %v64 = vmul.f32 %v61, %v61
    %v65 = vmul.f32 %v62, %v62
    %v66 = vadd.f32 %v64, %v65
    %v67 = vadd.f32 %v63, %v66
    %68 = vst [vmem:[#allocation2] sm:$0xff] %v67
    // Predicated region
    $region22: #{tpu_custom_call.1} parent=1 // pred_check
      %p69 = pneg %p52
    $region23: #{tpu_custom_call.1} parent=1 // pred_check_branch
      %71 = sbr.rel (%p69) target = $region25
    $region24: #{tpu_custom_call.1} parent=1 // pred_region
      %v72 = vld [vmem:[#allocation2] sm:$0xff]
      %73 = vst [vmem:[#allocation8] sm:$0xff] %v72
    $region25: #{tpu_custom_call.1} parent=1 // pred_fallthru
      _
    // Predicated region
    $region26: #{tpu_custom_call.1} parent=1 // pred_check
      _
    $region27: #{tpu_custom_call.1} parent=1 // pred_check_branch
      %75 = sbr.rel (0) target = $region29
    $region28: #{tpu_custom_call.1} parent=1 // pred_region
      %s77 = ssub.s32 128, 128
      %78 = vsyncadd [#allocation5], %s77
      %s80 = sshll.u32 [#allocation8], 4
      %s81 = int_to_ptr.vmem [resolvable:$true] %s80
      %83 = dma.vmem_to_hbm [thread:$0]  %s81, 128, %s2, [#allocation5]
    $region29: #{tpu_custom_call.1} parent=1 // pred_fallthru
      _
    // Predicated region
    $region30: #{tpu_custom_call.1} parent=1 // pred_check
      _
    $region31: #{tpu_custom_call.1} parent=1 // pred_check_branch
      %85 = sbr.rel (0) target = $region33
    $region32: #{tpu_custom_call.1} parent=1 // pred_region
      %86 = dma.done [#allocation5], 128
    $region33: #{tpu_custom_call.1} parent=1 // pred_fallthru
      _
    %87 = vsyncpa [#allocation4], 1
    %88 = vsyncpa [#allocation7], 1
    %89 = vsyncpa [#allocation5], 1

</llo_original>
